<compile_context>
chip_gen: v7x
topology: tpu7x:2x2x1
jax: 0.10.0
libtpu: 0.0.40
codegen_flags: <defaults>
</compile_context>

<pallas_src>
import functools

import jax
import jax.numpy as jnp
from jax.experimental import pallas as pl
from jax.experimental.pallas import tpu as pltpu

D_HIDDEN = 128     # hidden width of the MLP (nn.Linear(dim_in, 128))
D_OUT_PAD = 128    # lane-dense padded output width
NEG_BIG = -1e30    # finite "minus infinity" for padded logit lanes


def _round_up(n, m):
    return ((n + m - 1) // m) * m


def mlp_kernel(x_ref, w1_ref, b1_ref, w2_ref, b2_ref, o_ref):
    # x_ref : (TILE_B, D_in) bf16      w1_ref: (D_in, 128) bf16   b1_ref: (1, 128) f32
    # w2_ref: (128, D_OUT_PAD) bf16    b2_ref: (1, D_OUT_PAD) f32 o_ref : (TILE_B, D_OUT_PAD) f32
    x = x_ref[...]
    # layer_input (bf16 x bf16 -> f32 accumulate on the MXU) + bias + ReLU
    h = jnp.dot(x, w1_ref[...], preferred_element_type=jnp.float32) + b1_ref[...]
    h = jnp.maximum(h, 0.0)
    # layer_out; padded lanes get logit -1e30 from the bias -> exp() == 0
    logits = jnp.dot(h.astype(jnp.bfloat16), w2_ref[...],
                     preferred_element_type=jnp.float32) + b2_ref[...]
    # numerically stable softmax over dim=1 (f32 throughout, exact divide --
    # it hides completely under the x DMA in this HBM-bound kernel)
    m = jnp.max(logits, axis=1, keepdims=True)
    e = jnp.exp(logits - m)
    denom = jnp.sum(e, axis=1, keepdims=True)
    o_ref[...] = e / denom


def prepare_params(w1, b1, w2, b2):
    """One-time conversion of PyTorch-layout params to kernel layout.

    w1: (128, D_in), b1: (128,), w2: (d_out, 128), b2: (d_out,)  ->
    w1t: (D_in, 128) bf16, b1r: (1, 128) f32,
    w2t_pad: (128, 128) bf16, b2_pad: (1, 128) f32.
    """
    d_out = w2.shape[0]
    w1t = jnp.asarray(w1, jnp.float32).T.astype(jnp.bfloat16)      # (D_in, 128)
    b1r = jnp.asarray(b1, jnp.float32).reshape(1, D_HIDDEN)        # (1, 128)
    w2t_pad = jnp.zeros((D_HIDDEN, D_OUT_PAD), jnp.float32)
    w2t_pad = w2t_pad.at[:, :d_out].set(jnp.asarray(w2, jnp.float32).T)
    w2t_pad = w2t_pad.astype(jnp.bfloat16)
    b2_pad = jnp.full((1, D_OUT_PAD), NEG_BIG, jnp.float32)
    b2_pad = b2_pad.at[0, :d_out].set(jnp.asarray(b2, jnp.float32))
    return w1t, b1r, w2t_pad, b2_pad, d_out


def _pick_tile(B, tile_b):
    """Batch tile: multiple of 8 sublanes, capped so the grid has >= 2 steps
    when B allows it (keeps both v7x TensorCores busy via "parallel")."""
    rows8 = _round_up(max(B, 1), 8)
    tb = min(tile_b, _round_up(pl.cdiv(rows8, 2), 8))
    return max(tb, 8)


def _vmem_bytes_needed(tb, d_in):
    x_tile = tb * d_in * 2                 # bf16 input tile
    o_tile = tb * D_OUT_PAD * 4            # f32 output tile
    weights = (d_in * D_HIDDEN * 2 + D_HIDDEN * D_OUT_PAD * 2
               + D_HIDDEN * 4 + D_OUT_PAD * 4)
    # double-buffered tiles + (possibly double-buffered) resident weights + margin
    return 2 * (x_tile + o_tile) + 2 * weights + (2 << 20)


@functools.partial(jax.jit, static_argnames=("d_out", "tile_b", "trim_output"))
def mlp_forward(x_nchw, w1t, b1r, w2t_pad, b2_pad, *, d_out,
                tile_b=1024, trim_output=True):
    """x_nchw: (B, C, H, W); params from prepare_params()."""
    B = x_nchw.shape[0]
    d_in = 1
    for s in x_nchw.shape[1:]:
        d_in *= s
    # == torch x.view(-1, C*H*W); bf16 halves the kernel's dominant HBM read.
    x2d = x_nchw.reshape(B, d_in).astype(jnp.bfloat16)

    tb = _pick_tile(B, tile_b)
    grid = (pl.cdiv(B, tb),)               # ragged last block masked by Pallas

    # Only raise the scoped-VMEM limit if the working set actually needs it
    # (never blanket-request the full 64 MiB physical VMEM on v7x).
    need = _vmem_bytes_needed(tb, d_in)
    vmem_limit = need if need > (32 << 20) else None

    out = pl.pallas_call(
        mlp_kernel,
        out_shape=jax.ShapeDtypeStruct((B, D_OUT_PAD), jnp.float32),
        grid=grid,
        in_specs=[
            pl.BlockSpec((tb, d_in), lambda i: (i, 0)),            # x tile (pipelined)
            pl.BlockSpec((d_in, D_HIDDEN), lambda i: (0, 0)),      # w1: VMEM-resident
            pl.BlockSpec((1, D_HIDDEN), lambda i: (0, 0)),         # b1: VMEM-resident
            pl.BlockSpec((D_HIDDEN, D_OUT_PAD), lambda i: (0, 0)), # w2: VMEM-resident
            pl.BlockSpec((1, D_OUT_PAD), lambda i: (0, 0)),        # b2: VMEM-resident
        ],
        out_specs=pl.BlockSpec((tb, D_OUT_PAD), lambda i: (i, 0)),
        compiler_params=pltpu.CompilerParams(
            dimension_semantics=("parallel",),    # shard batch across TCs on v7x
            vmem_limit_bytes=vmem_limit,
        ),
    )(x2d, w1t, b1r, w2t_pad, b2_pad)

    if trim_output:
        return out[:, :d_out]     # module semantics: (B, d_out) probabilities
    return out                    # lane-padded (B, 128); padded columns are 0


def reference_forward(x_nchw, w1, b1, w2, b2):
    B = x_nchw.shape[0]
    x = x_nchw.reshape(B, -1)
    h = jnp.maximum(x @ w1.T + b1, 0.0)
    logits = h @ w2.T + b2
    return jax.nn.softmax(logits, axis=1)


if __name__ == "__main__":
    key = jax.random.PRNGKey(0)
    # Small shapes consistent with the forward: NCHW input, dim_in = C*H*W.
    B, C, H, W = 2, 4, 16, 16
    d_in = C * H * W
    d_out = 10

    kx, kw1, kb1, kw2, kb2 = jax.random.split(key, 5)
    x = jax.random.normal(kx, (B, C, H, W), dtype=jnp.float32)

    # Deterministic parameter init (uniform, roughly PyTorch Linear scale).
    lim1 = 1.0 / (d_in ** 0.5)
    lim2 = 1.0 / (D_HIDDEN ** 0.5)
    w1 = jax.random.uniform(kw1, (D_HIDDEN, d_in), jnp.float32, -lim1, lim1)
    b1 = jax.random.uniform(kb1, (D_HIDDEN,), jnp.float32, -lim1, lim1)
    w2 = jax.random.uniform(kw2, (d_out, D_HIDDEN), jnp.float32, -lim2, lim2)
    b2 = jax.random.uniform(kb2, (d_out,), jnp.float32, -lim2, lim2)

    # One-time param layout conversion (no per-call HBM transpose).
    w1t, b1r, w2t_pad, b2_pad, d_out_real = prepare_params(w1, b1, w2, b2)

    out = mlp_forward(x, w1t, b1r, w2t_pad, b2_pad, d_out=d_out_real)
    out = jax.block_until_ready(out)

    ref = reference_forward(x, w1, b1, w2, b2)
    assert out.shape == (B, d_out)
    # bf16 matmul inputs (f32 accumulation) vs f32 reference -> ~1e-2 tolerance
    assert jnp.allclose(out, ref, atol=1e-2, rtol=1e-2)
    # exact divide -> rows sum to 1 within f32 rounding
    assert jnp.allclose(jnp.sum(out, axis=1), jnp.ones((B,)), atol=1e-5)

    print("KERNEL_OK")
</pallas_src>

<mosaic_0001>
module attributes {stable_mosaic.version = 11 : i64} {
  func.func @mlp_kernel(%arg0: i32, %arg1: memref<8x1024xbf16, #tpu.memory_space<vmem>>, %arg2: memref<1024x128xbf16, #tpu.memory_space<vmem>>, %arg3: memref<1x128xf32, #tpu.memory_space<vmem>>, %arg4: memref<128x128xbf16, #tpu.memory_space<vmem>>, %arg5: memref<1x128xf32, #tpu.memory_space<vmem>>, %arg6: memref<8x128xf32, #tpu.memory_space<vmem>>) attributes {dimension_semantics = [#tpu.dimension_semantics<parallel>], iteration_bounds = array<i64: 1>, scalar_prefetch = 0 : i64, scratch_operands = 0 : i64, tpu.core_type = #tpu.core_type<tc>, window_params = [{transform_indices = @transform_0, window_bounds = array<i64: 8, 1024>}, {pipeline_mode = #tpu.pipeline_mode<synchronous>, transform_indices = @transform_1, window_bounds = array<i64: 1024, 128>}, {pipeline_mode = #tpu.pipeline_mode<synchronous>, transform_indices = @transform_2, window_bounds = array<i64: 1, 128>}, {pipeline_mode = #tpu.pipeline_mode<synchronous>, transform_indices = @transform_3, window_bounds = array<i64: 128, 128>}, {pipeline_mode = #tpu.pipeline_mode<synchronous>, transform_indices = @transform_4, window_bounds = array<i64: 1, 128>}, {transform_indices = @transform_5, window_bounds = array<i64: 8, 128>}]} {
    %c0 = arith.constant 0 : index
    %c0_0 = arith.constant 0 : index
    %0 = vector.load %arg1[%c0, %c0_0] : memref<8x1024xbf16, #tpu.memory_space<vmem>>, vector<8x1024xbf16>
    %c0_1 = arith.constant 0 : index
    %c0_2 = arith.constant 0 : index
    %1 = vector.load %arg2[%c0_1, %c0_2] : memref<1024x128xbf16, #tpu.memory_space<vmem>>, vector<1024x128xbf16>
    %cst = arith.constant dense<0.000000e+00> : vector<8x128xf32>
    %2 = tpu.matmul %0, %1, %cst {dimension_numbers = #tpu.dot_dimension_numbers<[1], [0], [0], [1], [0, 0, 1, 1], [], []>} : vector<8x1024xbf16>, vector<1024x128xbf16>, vector<8x128xf32> -> vector<8x128xf32>
    %c0_3 = arith.constant 0 : index
    %c0_4 = arith.constant 0 : index
    %3 = vector.load %arg3[%c0_3, %c0_4] : memref<1x128xf32, #tpu.memory_space<vmem>>, vector<1x128xf32>
    %4 = vector.broadcast %3 : vector<1x128xf32> to vector<8x128xf32>
    %5 = arith.addf %2, %4 : vector<8x128xf32>
    %cst_5 = arith.constant 0.000000e+00 : f32
    %6 = vector.broadcast %cst_5 : f32 to vector<8x128xf32>
    %7 = arith.maximumf %5, %6 : vector<8x128xf32>
    %8 = arith.truncf %7 : vector<8x128xf32> to vector<8x128xbf16>
    %c0_6 = arith.constant 0 : index
    %c0_7 = arith.constant 0 : index
    %9 = vector.load %arg4[%c0_6, %c0_7] : memref<128x128xbf16, #tpu.memory_space<vmem>>, vector<128x128xbf16>
    %cst_8 = arith.constant dense<0.000000e+00> : vector<8x128xf32>
    %10 = tpu.matmul %8, %9, %cst_8 {dimension_numbers = #tpu.dot_dimension_numbers<[1], [0], [0], [1], [0, 0, 1, 1], [], []>} : vector<8x128xbf16>, vector<128x128xbf16>, vector<8x128xf32> -> vector<8x128xf32>
    %c0_9 = arith.constant 0 : index
    %c0_10 = arith.constant 0 : index
    %11 = vector.load %arg5[%c0_9, %c0_10] : memref<1x128xf32, #tpu.memory_space<vmem>>, vector<1x128xf32>
    %12 = vector.broadcast %11 : vector<1x128xf32> to vector<8x128xf32>
    %13 = arith.addf %10, %12 : vector<8x128xf32>
    %cst_11 = arith.constant dense<0xFF800000> : vector<8xf32>
    %14 = vector.multi_reduction <maximumf>, %13, %cst_11 [1] : vector<8x128xf32> to vector<8xf32>
    %15 = vector.shape_cast %14 : vector<8xf32> to vector<8x1xf32>
    %16 = vector.broadcast %15 : vector<8x1xf32> to vector<8x128xf32>
    %17 = arith.subf %13, %16 : vector<8x128xf32>
    %18 = math.exp %17 : vector<8x128xf32>
    %cst_12 = arith.constant dense<0.000000e+00> : vector<8xf32>
    %19 = vector.multi_reduction <add>, %18, %cst_12 [1] : vector<8x128xf32> to vector<8xf32>
    %20 = vector.shape_cast %19 : vector<8xf32> to vector<8x1xf32>
    %21 = vector.broadcast %20 : vector<8x1xf32> to vector<8x128xf32>
    %22 = arith.divf %18, %21 : vector<8x128xf32>
    %c0_13 = arith.constant 0 : index
    %c0_14 = arith.constant 0 : index
    %23 = vector.load %arg6[%c0_13, %c0_14] : memref<8x128xf32, #tpu.memory_space<vmem>>, vector<8x128xf32>
    tpu.vector_store %arg6[%c0_13, %c0_14], %22 {strides = array<i32>} : memref<8x128xf32, #tpu.memory_space<vmem>>, vector<8x128xf32>,
    return
  }
  func.func @transform_0(%arg0: i32) -> (i32, i32) {
    %c0_i32 = arith.constant 0 : i32
    %c0_i32_0 = arith.constant 0 : i32
    return %arg0, %c0_i32 : i32, i32
  }
  func.func @transform_1(%arg0: i32) -> (i32, i32) {
    %c0_i32 = arith.constant 0 : i32
    %c0_i32_0 = arith.constant 0 : i32
    %c0_i32_1 = arith.constant 0 : i32
    return %c0_i32, %c0_i32_0 : i32, i32
  }
  func.func @transform_2(%arg0: i32) -> (i32, i32) {
    %c0_i32 = arith.constant 0 : i32
    %c0_i32_0 = arith.constant 0 : i32
    %c0_i32_1 = arith.constant 0 : i32
    return %c0_i32, %c0_i32_0 : i32, i32
  }
  func.func @transform_3(%arg0: i32) -> (i32, i32) {
    %c0_i32 = arith.constant 0 : i32
    %c0_i32_0 = arith.constant 0 : i32
    %c0_i32_1 = arith.constant 0 : i32
    return %c0_i32, %c0_i32_0 : i32, i32
  }
  func.func @transform_4(%arg0: i32) -> (i32, i32) {
    %c0_i32 = arith.constant 0 : i32
    %c0_i32_0 = arith.constant 0 : i32
    %c0_i32_1 = arith.constant 0 : i32
    return %c0_i32, %c0_i32_0 : i32, i32
  }
  func.func @transform_5(%arg0: i32) -> (i32, i32) {
    %c0_i32 = arith.constant 0 : i32
    %c0_i32_0 = arith.constant 0 : i32
    return %arg0, %c0_i32 : i32, i32
  }
}

</mosaic_0001>

<llo_original>
// kernel: mlp_forward.1
$region0: #{mlp_forward.1}
  #allocation0 [shape = 'u32[]', space=smem, size = 0x4, offset = 0x4, fixed_abs, tag = 'smem constant byte address 0x4 - core index']
  #allocation1 [shape = 'u32[144,128]{1,0:T(1,128)}', space=vmem, size = 0x12000, scoped, tag = 'internal scratch']
  %s0 = inlined_call_operand.vmem [shape: bf16[2,1024], index: 0, kind: input, shape index: {}]
  %s1 = inlined_call_operand.hbm [shape: bf16[1024,128], index: 1, kind: input, shape index: {}]
  %s2 = inlined_call_operand.vmem [shape: f32[1,128], index: 2, kind: input, shape index: {}]
  %s3 = inlined_call_operand.vmem [shape: bf16[128,128], index: 3, kind: input, shape index: {}]
  %s4 = inlined_call_operand.vmem [shape: f32[1,128], index: 4, kind: input, shape index: {}]
  %s5 = inlined_call_operand.hbm [shape: f32[2,128], index: 5, kind: output, shape index: {}]
  %s6 = sld [smem:[#allocation0]]
  $region34: #{mlp_forward.1} parent=0
    _
  %s8 = ssub.s32 1, %s6
  %s9 = scalar_select 0, %s8, %s6
  $region1: #{mlp_forward.1} parent=0
    #allocation2 [shape = 'u8[262144]{0}', space=vmem, size = 0x40000, scoped, tag = 'input window, operand 1, single buffered']
    #allocation3 [shape = 's32[1]{0}', space=sflag, size = 0x4, scoped, tag = 'scoped memory for mlp_forward.1']
    #allocation4 [shape = 's32[1]{0}', space=sflag, size = 0x4, scoped, tag = 'scoped memory for mlp_forward.1']
    #allocation5 [shape = 'u8[4096]{0}', space=vmem, size = 0x1000, scoped, tag = 'output window, operand 0, single buffered']
    %10 = vsyncpa [#allocation3], 0
    %11 = vsyncpa [#allocation4], 0
    // Predicated region
    $region2: #{mlp_forward.1} parent=1 // pred_check
      _
    $region3: #{mlp_forward.1} parent=1 // pred_check_branch
      %13 = sbr.rel (0) target = $region5
    $region4: #{mlp_forward.1} parent=1 // pred_region
      _
    $region5: #{mlp_forward.1} parent=1 // pred_fallthru
      _
    // Predicated region
    $region6: #{mlp_forward.1} parent=1 // pred_check
      _
    $region7: #{mlp_forward.1} parent=1 // pred_check_branch
      %15 = sbr.rel (0) target = $region9
    $region8: #{mlp_forward.1} parent=1 // pred_region
      %s17 = ssub.s32 8192, 8192
      %18 = vsyncadd [#allocation3], %s17
      %s19 = sshll.u32 [#allocation2], 4
      %s20 = int_to_ptr.vmem [resolvable:$true] %s19
      %25 = dma.hbm_to_vmem [thread:$0]  %s1, 8192, %s20, [#allocation3], 64, 64, 4
    $region9: #{mlp_forward.1} parent=1 // pred_fallthru
      _
    // Predicated region
    $region10: #{mlp_forward.1} parent=1 // pred_check
      _
    $region11: #{mlp_forward.1} parent=1 // pred_check_branch
      %27 = sbr.rel (0) target = $region13
    $region12: #{mlp_forward.1} parent=1 // pred_region
      _
    $region13: #{mlp_forward.1} parent=1 // pred_fallthru
      _
    // Predicated region
    $region14: #{mlp_forward.1} parent=1 // pred_check
      _
    $region15: #{mlp_forward.1} parent=1 // pred_check_branch
      %29 = sbr.rel (0) target = $region17
    $region16: #{mlp_forward.1} parent=1 // pred_region
      _
    $region17: #{mlp_forward.1} parent=1 // pred_fallthru
      _
    // Predicated region
    $region18: #{mlp_forward.1} parent=1 // pred_check
      _
    $region19: #{mlp_forward.1} parent=1 // pred_check_branch
      %31 = sbr.rel (0) target = $region21
    $region20: #{mlp_forward.1} parent=1 // pred_region
      _
    $region21: #{mlp_forward.1} parent=1 // pred_fallthru
      _
    // Predicated region
    $region22: #{mlp_forward.1} parent=1 // pred_check
      _
    $region23: #{mlp_forward.1} parent=1 // pred_check_branch
      %33 = sbr.rel (0) target = $region25
    $region24: #{mlp_forward.1} parent=1 // pred_region
      %34 = dma.done [#allocation3], 8192
    $region25: #{mlp_forward.1} parent=1 // pred_fallthru
      _
    %v36 = vld [vmem:[%s0] sm:$0xff]
    %v37 = vld [vmem:[%s0 + $0x8] sm:$0xff]
    %v38 = vld [vmem:[%s0 + $0x10] sm:$0xff]
    %v39 = vld [vmem:[%s0 + $0x18] sm:$0xff]
    %v40 = vld [vmem:[#allocation2] sm:$0xf]
    %v41 = vld [vmem:[#allocation2 + $0x4] sm:$0xf]
    %v42 = vld [vmem:[#allocation2 + $0x8] sm:$0xf]
    %v43 = vld [vmem:[#allocation2 + $0xc] sm:$0xf]
    %v44 = vld [vmem:[#allocation2 + $0x10] sm:$0xf]
    %v45 = vld [vmem:[#allocation2 + $0x14] sm:$0xf]
    %v46 = vld [vmem:[#allocation2 + $0x18] sm:$0xf]
    %v47 = vld [vmem:[#allocation2 + $0x1c] sm:$0xf]
    %v48 = vld [vmem:[#allocation2 + $0x20] sm:$0xf]
    %v49 = vld [vmem:[#allocation2 + $0x24] sm:$0xf]
    %v50 = vld [vmem:[#allocation2 + $0x28] sm:$0xf]
    %v51 = vld [vmem:[#allocation2 + $0x2c] sm:$0xf]
    %v52 = vld [vmem:[#allocation2 + $0x30] sm:$0xf]
    %v53 = vld [vmem:[#allocation2 + $0x34] sm:$0xf]
    %v54 = vld [vmem:[#allocation2 + $0x38] sm:$0xf]
    %v55 = vld [vmem:[#allocation2 + $0x3c] sm:$0xf]
    %v56 = vld [vmem:[#allocation2 + $0x40] sm:$0xf]
    %v57 = vld [vmem:[#allocation2 + $0x44] sm:$0xf]
    %v58 = vld [vmem:[#allocation2 + $0x48] sm:$0xf]
    %v59 = vld [vmem:[#allocation2 + $0x4c] sm:$0xf]
    %v60 = vld [vmem:[#allocation2 + $0x50] sm:$0xf]
    %v61 = vld [vmem:[#allocation2 + $0x54] sm:$0xf]
    %v62 = vld [vmem:[#allocation2 + $0x58] sm:$0xf]
    %v63 = vld [vmem:[#allocation2 + $0x5c] sm:$0xf]
    %v64 = vld [vmem:[#allocation2 + $0x60] sm:$0xf]
    %v65 = vld [vmem:[#allocation2 + $0x64] sm:$0xf]
    %v66 = vld [vmem:[#allocation2 + $0x68] sm:$0xf]
    %v67 = vld [vmem:[#allocation2 + $0x6c] sm:$0xf]
    %v68 = vld [vmem:[#allocation2 + $0x70] sm:$0xf]
    %v69 = vld [vmem:[#allocation2 + $0x74] sm:$0xf]
    %v70 = vld [vmem:[#allocation2 + $0x78] sm:$0xf]
    %v71 = vld [vmem:[#allocation2 + $0x7c] sm:$0xf]
    %v72 = vld [vmem:[#allocation2 + $0x80] sm:$0xf]
    %v73 = vld [vmem:[#allocation2 + $0x84] sm:$0xf]
    %v74 = vld [vmem:[#allocation2 + $0x88] sm:$0xf]
    %v75 = vld [vmem:[#allocation2 + $0x8c] sm:$0xf]
    %v76 = vld [vmem:[#allocation2 + $0x90] sm:$0xf]
    %v77 = vld [vmem:[#allocation2 + $0x94] sm:$0xf]
    %v78 = vld [vmem:[#allocation2 + $0x98] sm:$0xf]
    %v79 = vld [vmem:[#allocation2 + $0x9c] sm:$0xf]
    %v80 = vld [vmem:[#allocation2 + $0xa0] sm:$0xf]
    %v81 = vld [vmem:[#allocation2 + $0xa4] sm:$0xf]
    %v82 = vld [vmem:[#allocation2 + $0xa8] sm:$0xf]
    %v83 = vld [vmem:[#allocation2 + $0xac] sm:$0xf]
    %v84 = vld [vmem:[#allocation2 + $0xb0] sm:$0xf]
    %v85 = vld [vmem:[#allocation2 + $0xb4] sm:$0xf]
    %v86 = vld [vmem:[#allocation2 + $0xb8] sm:$0xf]
    %v87 = vld [vmem:[#allocation2 + $0xbc] sm:$0xf]
    %v88 = vld [vmem:[#allocation2 + $0xc0] sm:$0xf]
    %v89 = vld [vmem:[#allocation2 + $0xc4] sm:$0xf]
    %v90 = vld [vmem:[#allocation2 + $0xc8] sm:$0xf]
    %v91 = vld [vmem:[#allocation2 + $0xcc] sm:$0xf]
    %v92 = vld [vmem:[#allocation2 + $0xd0] sm:$0xf]
    %v93 = vld [vmem:[#allocation2 + $0xd4] sm:$0xf]
    %v94 = vld [vmem:[#allocation2 + $0xd8] sm:$0xf]
    %v95 = vld [vmem:[#allocation2 + $0xdc] sm:$0xf]
    %v96 = vld [vmem:[#allocation2 + $0xe0] sm:$0xf]
    %v97 = vld [vmem:[#allocation2 + $0xe4] sm:$0xf]
    %v98 = vld [vmem:[#allocation2 + $0xe8] sm:$0xf]
    %v99 = vld [vmem:[#allocation2 + $0xec] sm:$0xf]
    %v100 = vld [vmem:[#allocation2 + $0xf0] sm:$0xf]
    %v101 = vld [vmem:[#allocation2 + $0xf4] sm:$0xf]
    %v102 = vld [vmem:[#allocation2 + $0xf8] sm:$0xf]
    %v103 = vld [vmem:[#allocation2 + $0xfc] sm:$0xf]
    %v104 = vld [vmem:[#allocation2 + $0x100] sm:$0xf]
    %v105 = vld [vmem:[#allocation2 + $0x104] sm:$0xf]
    %v106 = vld [vmem:[#allocation2 + $0x108] sm:$0xf]
    %v107 = vld [vmem:[#allocation2 + $0x10c] sm:$0xf]
    %v108 = vld [vmem:[#allocation2 + $0x110] sm:$0xf]
    %v109 = vld [vmem:[#allocation2 + $0x114] sm:$0xf]
    %v110 = vld [vmem:[#allocation2 + $0x118] sm:$0xf]
    %v111 = vld [vmem:[#allocation2 + $0x11c] sm:$0xf]
    %v112 = vld [vmem:[#allocation2 + $0x120] sm:$0xf]
    %v113 = vld [vmem:[#allocation2 + $0x124] sm:$0xf]
    %v114 = vld [vmem:[#allocation2 + $0x128] sm:$0xf]
    %v115 = vld [vmem:[#allocation2 + $0x12c] sm:$0xf]
    %v116 = vld [vmem:[#allocation2 + $0x130] sm:$0xf]
    %v117 = vld [vmem:[#allocation2 + $0x134] sm:$0xf]
    %v118 = vld [vmem:[#allocation2 + $0x138] sm:$0xf]
    %v119 = vld [vmem:[#allocation2 + $0x13c] sm:$0xf]
    %v120 = vld [vmem:[#allocation2 + $0x140] sm:$0xf]
    %v121 = vld [vmem:[#allocation2 + $0x144] sm:$0xf]
    %v122 = vld [vmem:[#allocation2 + $0x148] sm:$0xf]
    %v123 = vld [vmem:[#allocation2 + $0x14c] sm:$0xf]
    %v124 = vld [vmem:[#allocation2 + $0x150] sm:$0xf]
    %v125 = vld [vmem:[#allocation2 + $0x154] sm:$0xf]
    %v126 = vld [vmem:[#allocation2 + $0x158] sm:$0xf]
    %v127 = vld [vmem:[#allocation2 + $0x15c] sm:$0xf]
    %v128 = vld [vmem:[#allocation2 + $0x160] sm:$0xf]
    %v129 = vld [vmem:[#allocation2 + $0x164] sm:$0xf]
    %v130 = vld [vmem:[#allocation2 + $0x168] sm:$0xf]
    %v131 = vld [vmem:[#allocation2 + $0x16c] sm:$0xf]
    %v132 = vld [vmem:[#allocation2 + $0x170] sm:$0xf]
    %v133 = vld [vmem:[#allocation2 + $0x174] sm:$0xf]
    %v134 = vld [vmem:[#allocation2 + $0x178] sm:$0xf]
    %v135 = vld [vmem:[#allocation2 + $0x17c] sm:$0xf]
    %v136 = vld [vmem:[#allocation2 + $0x180] sm:$0xf]
    %v137 = vld [vmem:[#allocation2 + $0x184] sm:$0xf]
    %v138 = vld [vmem:[#allocation2 + $0x188] sm:$0xf]
    %v139 = vld [vmem:[#allocation2 + $0x18c] sm:$0xf]
    %v140 = vld [vmem:[#allocation2 + $0x190] sm:$0xf]
    %v141 = vld [vmem:[#allocation2 + $0x194] sm:$0xf]
    %v142 = vld [vmem:[#allocation2 + $0x198] sm:$0xf]
    %v143 = vld [vmem:[#allocation2 + $0x19c] sm:$0xf]
    %v144 = vld [vmem:[#allocation2 + $0x1a0] sm:$0xf]
    %v145 = vld [vmem:[#allocation2 + $0x1a4] sm:$0xf]
    %v146 = vld [vmem:[#allocation2 + $0x1a8] sm:$0xf]
    %v147 = vld [vmem:[#allocation2 + $0x1ac] sm:$0xf]
    %v148 = vld [vmem:[#allocation2 + $0x1b0] sm:$0xf]
    %v149 = vld [vmem:[#allocation2 + $0x1b4] sm:$0xf]
    %v150 = vld [vmem:[#allocation2 + $0x1b8] sm:$0xf]
    %v151 = vld [vmem:[#allocation2 + $0x1bc] sm:$0xf]
    %v152 = vld [vmem:[#allocation2 + $0x1c0] sm:$0xf]
    %v153 = vld [vmem:[#allocation2 + $0x1c4] sm:$0xf]
    %v154 = vld [vmem:[#allocation2 + $0x1c8] sm:$0xf]
    %v155 = vld [vmem:[#allocation2 + $0x1cc] sm:$0xf]
    %v156 = vld [vmem:[#allocation2 + $0x1d0] sm:$0xf]
    %v157 = vld [vmem:[#allocation2 + $0x1d4] sm:$0xf]
    %v158 = vld [vmem:[#allocation2 + $0x1d8] sm:$0xf]
    %v159 = vld [vmem:[#allocation2 + $0x1dc] sm:$0xf]
    %v160 = vld [vmem:[#allocation2 + $0x1e0] sm:$0xf]
    %v161 = vld [vmem:[#allocation2 + $0x1e4] sm:$0xf]
    %v162 = vld [vmem:[#allocation2 + $0x1e8] sm:$0xf]
    %v163 = vld [vmem:[#allocation2 + $0x1ec] sm:$0xf]
    %v164 = vld [vmem:[#allocation2 + $0x1f0] sm:$0xf]
    %v165 = vld [vmem:[#allocation2 + $0x1f4] sm:$0xf]
    %v166 = vld [vmem:[#allocation2 + $0x1f8] sm:$0xf]
    %v167 = vld [vmem:[#allocation2 + $0x1fc] sm:$0xf]
    %v168 = vld [vmem:[%s2] sm:$0x1]
    %v170 = vlaneseq
    %v171 = vshrl.u32 %v170, 7
    %v172 = vsub.s32 0, %v171
    %v173 = vrot.slane %v168, %v172
    %v179 = vcombine.low %v36, %v37
    %v180 = vcombine.high %v36, %v37
    %v181 = vcombine.low %v38, %v39
    %v182 = vcombine.high %v38, %v39
    %v184 = vunpack.c.l.s4 1966171168
    %v185 = vunpack.c.0.s8 %v184
    %v186 = vlaneseq
    %v187 = vshrl.u32 %v186, 7
    %v188 = vsub.s32 %v185, %v187
    %v189 = vrot.slane %v179, %v188
    %v191 = vunpack.c.l.s4 1966171168
    %v192 = vunpack.c.0.s8 %v191
    %v193 = vlaneseq
    %v194 = vshrl.u32 %v193, 7
    %v195 = vsub.s32 %v192, %v194
    %v196 = vrot.slane %v180, %v195
    %v198 = vunpack.c.l.s4 1966171168
    %v199 = vunpack.c.0.s8 %v198
    %v200 = vlaneseq
    %v201 = vshrl.u32 %v200, 7
    %v202 = vsub.s32 %v199, %v201
    %v203 = vrot.slane %v181, %v202
    %v205 = vunpack.c.l.s4 1966171168
    %v206 = vunpack.c.0.s8 %v205
    %v207 = vlaneseq
    %v208 = vshrl.u32 %v207, 7
    %v209 = vsub.s32 %v206, %v208
    %v210 = vrot.slane %v182, %v209
    %v211 = vcombine.low %v189, %v203
    %v212 = vcombine.high %v189, %v203
    %v213 = vcombine.low %v196, %v210
    %v214 = vcombine.high %v196, %v210
    %v216 = vunpack.c.l.s4 1966171168
    %v217 = vunpack.c.0.s8 %v216
    %v218 = vlaneseq
    %v219 = vshrl.u32 %v218, 7
    %v220 = vsub.s32 %v217, %v219
    %v221 = vrot.slane %v211, %v220
    %v223 = vunpack.c.l.s4 1966171168
    %v224 = vunpack.c.0.s8 %v223
    %v225 = vlaneseq
    %v226 = vshrl.u32 %v225, 7
    %v227 = vsub.s32 %v224, %v226
    %v228 = vrot.slane %v213, %v227
    %v230 = vunpack.c.l.s4 1966171168
    %v231 = vunpack.c.0.s8 %v230
    %v232 = vlaneseq
    %v233 = vshrl.u32 %v232, 7
    %v234 = vsub.s32 %v231, %v233
    %v235 = vrot.slane %v212, %v234
    %v237 = vunpack.c.l.s4 1966171168
    %v238 = vunpack.c.0.s8 %v237
    %v239 = vlaneseq
    %v240 = vshrl.u32 %v239, 7
    %v241 = vsub.s32 %v238, %v240
    %v242 = vrot.slane %v214, %v241
    %v243 = vcombine.high %v221, %v221
    %v244 = vcombine.high %v228, %v228
    %v245 = vcombine.high %v235, %v235
    %v246 = vcombine.high %v242, %v242
    %v383 = vunpack.c.l.b16 %v40
    %v384 = vunpack.c.l.b16 %v41
    %v385 = vunpack.c.l.b16 %v42
    %v386 = vunpack.c.l.b16 %v43
    %v387 = vunpack.c.l.b16 %v44
    %v388 = vunpack.c.l.b16 %v45
    %v389 = vunpack.c.l.b16 %v46
    %v390 = vunpack.c.l.b16 %v47
    %v391 = vunpack.c.l.b16 %v48
    %v392 = vunpack.c.l.b16 %v49
    %v393 = vunpack.c.l.b16 %v50
    %v394 = vunpack.c.l.b16 %v51
    %v395 = vunpack.c.l.b16 %v52
    %v396 = vunpack.c.l.b16 %v53
    %v397 = vunpack.c.l.b16 %v54
    %v398 = vunpack.c.l.b16 %v55
    %v399 = vunpack.c.l.b16 %v56
    %v400 = vunpack.c.l.b16 %v57
    %v401 = vunpack.c.l.b16 %v58
    %v402 = vunpack.c.l.b16 %v59
    %v403 = vunpack.c.l.b16 %v60
    %v404 = vunpack.c.l.b16 %v61
    %v405 = vunpack.c.l.b16 %v62
    %v406 = vunpack.c.l.b16 %v63
    %v407 = vunpack.c.l.b16 %v64
    %v408 = vunpack.c.l.b16 %v65
    %v409 = vunpack.c.l.b16 %v66
    %v410 = vunpack.c.l.b16 %v67
    %v411 = vunpack.c.l.b16 %v68
    %v412 = vunpack.c.l.b16 %v69
    %v413 = vunpack.c.l.b16 %v70
    %v414 = vunpack.c.l.b16 %v71
    %v415 = vunpack.c.l.b16 %v72
    %v416 = vunpack.c.l.b16 %v73
    %v417 = vunpack.c.l.b16 %v74
    %v418 = vunpack.c.l.b16 %v75
    %v419 = vunpack.c.l.b16 %v76
    %v420 = vunpack.c.l.b16 %v77
    %v421 = vunpack.c.l.b16 %v78
    %v422 = vunpack.c.l.b16 %v79
    %v423 = vunpack.c.l.b16 %v80
    %v424 = vunpack.c.l.b16 %v81
    %v425 = vunpack.c.l.b16 %v82
    %v426 = vunpack.c.l.b16 %v83
    %v427 = vunpack.c.l.b16 %v84
    %v428 = vunpack.c.l.b16 %v85
    %v429 = vunpack.c.l.b16 %v86
    %v430 = vunpack.c.l.b16 %v87
    %v431 = vunpack.c.l.b16 %v88
    %v432 = vunpack.c.l.b16 %v89
    %v433 = vunpack.c.l.b16 %v90
    %v434 = vunpack.c.l.b16 %v91
    %v435 = vunpack.c.l.b16 %v92
    %v436 = vunpack.c.l.b16 %v93
    %v437 = vunpack.c.l.b16 %v94
    %v438 = vunpack.c.l.b16 %v95
    %v439 = vunpack.c.l.b16 %v96
    %v440 = vunpack.c.l.b16 %v97
    %v441 = vunpack.c.l.b16 %v98
    %v442 = vunpack.c.l.b16 %v99
    %v443 = vunpack.c.l.b16 %v100
    %v444 = vunpack.c.l.b16 %v101
    %v445 = vunpack.c.l.b16 %v102
    %v446 = vunpack.c.l.b16 %v103
    %v447 = vunpack.c.l.b16 %v104
    %v448 = vunpack.c.l.b16 %v105
    %v449 = vunpack.c.l.b16 %v106
    %v450 = vunpack.c.l.b16 %v107
    %v451 = vunpack.c.l.b16 %v108
    %v452 = vunpack.c.l.b16 %v109
    %v453 = vunpack.c.l.b16 %v110
    %v454 = vunpack.c.l.b16 %v111
    %v455 = vunpack.c.l.b16 %v112
    %v456 = vunpack.c.l.b16 %v113
    %v457 = vunpack.c.l.b16 %v114
    %v458 = vunpack.c.l.b16 %v115
    %v459 = vunpack.c.l.b16 %v116
    %v460 = vunpack.c.l.b16 %v117
    %v461 = vunpack.c.l.b16 %v118
    %v462 = vunpack.c.l.b16 %v119
    %v463 = vunpack.c.l.b16 %v120
    %v464 = vunpack.c.l.b16 %v121
    %v465 = vunpack.c.l.b16 %v122
    %v466 = vunpack.c.l.b16 %v123
    %v467 = vunpack.c.l.b16 %v124
    %v468 = vunpack.c.l.b16 %v125
    %v469 = vunpack.c.l.b16 %v126
    %v470 = vunpack.c.l.b16 %v127
    %v471 = vunpack.c.l.b16 %v128
    %v472 = vunpack.c.l.b16 %v129
    %v473 = vunpack.c.l.b16 %v130
    %v474 = vunpack.c.l.b16 %v131
    %v475 = vunpack.c.l.b16 %v132
    %v476 = vunpack.c.l.b16 %v133
    %v477 = vunpack.c.l.b16 %v134
    %v478 = vunpack.c.l.b16 %v135
    %v479 = vunpack.c.l.b16 %v136
    %v480 = vunpack.c.l.b16 %v137
    %v481 = vunpack.c.l.b16 %v138
    %v482 = vunpack.c.l.b16 %v139
    %v483 = vunpack.c.l.b16 %v140
    %v484 = vunpack.c.l.b16 %v141
    %v485 = vunpack.c.l.b16 %v142
    %v486 = vunpack.c.l.b16 %v143
    %v487 = vunpack.c.l.b16 %v144
    %v488 = vunpack.c.l.b16 %v145
    %v489 = vunpack.c.l.b16 %v146
    %v490 = vunpack.c.l.b16 %v147
    %v491 = vunpack.c.l.b16 %v148
    %v492 = vunpack.c.l.b16 %v149
    %v493 = vunpack.c.l.b16 %v150
    %v494 = vunpack.c.l.b16 %v151
    %v495 = vunpack.c.l.b16 %v152
    %v496 = vunpack.c.l.b16 %v153
    %v497 = vunpack.c.l.b16 %v154
    %v498 = vunpack.c.l.b16 %v155
    %v499 = vunpack.c.l.b16 %v156
    %v500 = vunpack.c.l.b16 %v157
    %v501 = vunpack.c.l.b16 %v158
    %v502 = vunpack.c.l.b16 %v159
    %v503 = vunpack.c.l.b16 %v160
    %v504 = vunpack.c.l.b16 %v161
    %v505 = vunpack.c.l.b16 %v162
    %v506 = vunpack.c.l.b16 %v163
    %v507 = vunpack.c.l.b16 %v164
    %v508 = vunpack.c.l.b16 %v165
    %v509 = vunpack.c.l.b16 %v166
    %v510 = vunpack.c.l.b16 %v167
    %v511 = vpack.c.b16 %v384, %v383
    %v512 = vpack.c.b16 %v386, %v385
    %v513 = vpack.c.b16 %v388, %v387
    %v514 = vpack.c.b16 %v390, %v389
    %v515 = vpack.c.b16 %v392, %v391
    %v516 = vpack.c.b16 %v394, %v393
    %v517 = vpack.c.b16 %v396, %v395
    %v518 = vpack.c.b16 %v398, %v397
    %v519 = vpack.c.b16 %v400, %v399
    %v520 = vpack.c.b16 %v402, %v401
    %v521 = vpack.c.b16 %v404, %v403
    %v522 = vpack.c.b16 %v406, %v405
    %v523 = vpack.c.b16 %v408, %v407
    %v524 = vpack.c.b16 %v410, %v409
    %v525 = vpack.c.b16 %v412, %v411
    %v526 = vpack.c.b16 %v414, %v413
    %v527 = vpack.c.b16 %v416, %v415
    %v528 = vpack.c.b16 %v418, %v417
    %v529 = vpack.c.b16 %v420, %v419
    %v530 = vpack.c.b16 %v422, %v421
    %v531 = vpack.c.b16 %v424, %v423
    %v532 = vpack.c.b16 %v426, %v425
    %v533 = vpack.c.b16 %v428, %v427
    %v534 = vpack.c.b16 %v430, %v429
    %v535 = vpack.c.b16 %v432, %v431
    %v536 = vpack.c.b16 %v434, %v433
    %v537 = vpack.c.b16 %v436, %v435
    %v538 = vpack.c.b16 %v438, %v437
    %v539 = vpack.c.b16 %v440, %v439
    %v540 = vpack.c.b16 %v442, %v441
    %v541 = vpack.c.b16 %v444, %v443
    %v542 = vpack.c.b16 %v446, %v445
    %v543 = vpack.c.b16 %v448, %v447
    %v544 = vpack.c.b16 %v450, %v449
    %v545 = vpack.c.b16 %v452, %v451
    %v546 = vpack.c.b16 %v454, %v453
    %v547 = vpack.c.b16 %v456, %v455
    %v548 = vpack.c.b16 %v458, %v457
    %v549 = vpack.c.b16 %v460, %v459
    %v550 = vpack.c.b16 %v462, %v461
    %v551 = vpack.c.b16 %v464, %v463
    %v552 = vpack.c.b16 %v466, %v465
    %v553 = vpack.c.b16 %v468, %v467
    %v554 = vpack.c.b16 %v470, %v469
    %v555 = vpack.c.b16 %v472, %v471
    %v556 = vpack.c.b16 %v474, %v473
    %v557 = vpack.c.b16 %v476, %v475
    %v558 = vpack.c.b16 %v478, %v477
    %v559 = vpack.c.b16 %v480, %v479
    %v560 = vpack.c.b16 %v482, %v481
    %v561 = vpack.c.b16 %v484, %v483
    %v562 = vpack.c.b16 %v486, %v485
    %v563 = vpack.c.b16 %v488, %v487
    %v564 = vpack.c.b16 %v490, %v489
    %v565 = vpack.c.b16 %v492, %v491
    %v566 = vpack.c.b16 %v494, %v493
    %v567 = vpack.c.b16 %v496, %v495
    %v568 = vpack.c.b16 %v498, %v497
    %v569 = vpack.c.b16 %v500, %v499
    %v570 = vpack.c.b16 %v502, %v501
    %v571 = vpack.c.b16 %v504, %v503
    %v572 = vpack.c.b16 %v506, %v505
    %v573 = vpack.c.b16 %v508, %v507
    %v574 = vpack.c.b16 %v510, %v509
    %639 = vmatprep.subr.bf16.mxu0 0
    %640 = vmatpush1.bf16.msra.mxu0 %v511
    %641 = vmatprep.subr.bf16.mxu0 0
    %642 = vmatpush1.bf16.msra.mxu0 %v512
    %643 = vmatprep.subr.bf16.mxu0 0
    %644 = vmatpush1.bf16.msra.mxu0 %v513
    %645 = vmatprep.subr.bf16.mxu0 0
    %646 = vmatpush1.bf16.msra.mxu0 %v514
    %647 = vmatprep.subr.bf16.mxu0 0
    %648 = vmatpush1.bf16.msra.mxu0 %v515
    %649 = vmatprep.subr.bf16.mxu0 0
    %650 = vmatpush1.bf16.msra.mxu0 %v516
    %651 = vmatprep.subr.bf16.mxu0 0
    %652 = vmatpush1.bf16.msra.mxu0 %v517
    %653 = vmatprep.subr.bf16.mxu0 0
    %654 = vmatpush1.bf16.msra.mxu0 %v518
    %655 = vmatprep.subr.bf16.mxu0 0
    %656 = vmatpush1.bf16.msra.mxu0 %v519
    %657 = vmatprep.subr.bf16.mxu0 0
    %658 = vmatpush1.bf16.msra.mxu0 %v520
    %659 = vmatprep.subr.bf16.mxu0 0
    %660 = vmatpush1.bf16.msra.mxu0 %v521
    %661 = vmatprep.subr.bf16.mxu0 0
    %662 = vmatpush1.bf16.msra.mxu0 %v522
    %663 = vmatprep.subr.bf16.mxu0 0
    %664 = vmatpush1.bf16.msra.mxu0 %v523
    %665 = vmatprep.subr.bf16.mxu0 0
    %666 = vmatpush1.bf16.msra.mxu0 %v524
    %667 = vmatprep.subr.bf16.mxu0 0
    %668 = vmatpush1.bf16.msra.mxu0 %v525
    %669 = vmatprep.subr.bf16.mxu0 0
    %670 = vmatpush1.bf16.msra.mxu0 %v526
    %671 = vmatprep.mubr.bf16.mxu0 %v235
    %672 = vmatmul.mubr.bf16.gmra.mrb[0].mxu0 %v221
    %v673 = vpop.f32.mrb[0].mxu0
    %v674 = vadd.f32 %v173, %v673
    %v675 = vpop.f32.mrb[0].mxu0
    %v676 = vpop.f32.mrb[0].mxu0
    %v677 = vpop.f32.mrb[0].mxu0
    %678 = vdwg.mxu0
    %679 = vmatprep.subr.bf16.mxu0 0
    %680 = vmatpush1.bf16.msra.mxu0 %v527
    %681 = vmatprep.subr.bf16.mxu0 0
    %682 = vmatpush1.bf16.msra.mxu0 %v528
    %683 = vmatprep.subr.bf16.mxu0 0
    %684 = vmatpush1.bf16.msra.mxu0 %v529
    %685 = vmatprep.subr.bf16.mxu0 0
    %686 = vmatpush1.bf16.msra.mxu0 %v530
    %687 = vmatprep.subr.bf16.mxu0 0
    %688 = vmatpush1.bf16.msra.mxu0 %v531
    %689 = vmatprep.subr.bf16.mxu0 0
    %690 = vmatpush1.bf16.msra.mxu0 %v532
    %691 = vmatprep.subr.bf16.mxu0 0
    %692 = vmatpush1.bf16.msra.mxu0 %v533
    %693 = vmatprep.subr.bf16.mxu0 0
    %694 = vmatpush1.bf16.msra.mxu0 %v534
    %695 = vmatprep.subr.bf16.mxu0 0
    %696 = vmatpush1.bf16.msra.mxu0 %v535
    %697 = vmatprep.subr.bf16.mxu0 0
    %698 = vmatpush1.bf16.msra.mxu0 %v536
    %699 = vmatprep.subr.bf16.mxu0 0
    %700 = vmatpush1.bf16.msra.mxu0 %v537
    %701 = vmatprep.subr.bf16.mxu0 0
    %702 = vmatpush1.bf16.msra.mxu0 %v538
    %703 = vmatprep.subr.bf16.mxu0 0
    %704 = vmatpush1.bf16.msra.mxu0 %v539
    %705 = vmatprep.subr.bf16.mxu0 0
    %706 = vmatpush1.bf16.msra.mxu0 %v540
    %707 = vmatprep.subr.bf16.mxu0 0
    %708 = vmatpush1.bf16.msra.mxu0 %v541
    %709 = vmatprep.subr.bf16.mxu0 0
    %710 = vmatpush1.bf16.msra.mxu0 %v542
    %711 = vmatprep.mubr.bf16.mxu0 %v245
    %712 = vmatmul.mubr.bf16.gmra.mrb[0].mxu0 %v243
    %v713 = vpop.f32.mrb[0].mxu0
    %v714 = vadd.f32 %v674, %v713
    %v715 = vpop.f32.mrb[0].mxu0
    %v716 = vpop.f32.mrb[0].mxu0
    %v717 = vpop.f32.mrb[0].mxu0
    %718 = vdwg.mxu0
    %719 = vmatprep.subr.bf16.mxu0 0
    %720 = vmatpush1.bf16.msra.mxu0 %v543
    %721 = vmatprep.subr.bf16.mxu0 0
    %722 = vmatpush1.bf16.msra.mxu0 %v544
    %723 = vmatprep.subr.bf16.mxu0 0
    %724 = vmatpush1.bf16.msra.mxu0 %v545
    %725 = vmatprep.subr.bf16.mxu0 0
    %726 = vmatpush1.bf16.msra.mxu0 %v546
    %727 = vmatprep.subr.bf16.mxu0 0
    %728 = vmatpush1.bf16.msra.mxu0 %v547
    %729 = vmatprep.subr.bf16.mxu0 0
    %730 = vmatpush1.bf16.msra.mxu0 %v548
    %731 = vmatprep.subr.bf16.mxu0 0
    %732 = vmatpush1.bf16.msra.mxu0 %v549
    %733 = vmatprep.subr.bf16.mxu0 0
    %734 = vmatpush1.bf16.msra.mxu0 %v550
    %735 = vmatprep.subr.bf16.mxu0 0
    %736 = vmatpush1.bf16.msra.mxu0 %v551
    %737 = vmatprep.subr.bf16.mxu0 0
    %738 = vmatpush1.bf16.msra.mxu0 %v552
    %739 = vmatprep.subr.bf16.mxu0 0
    %740 = vmatpush1.bf16.msra.mxu0 %v553
    %741 = vmatprep.subr.bf16.mxu0 0
    %742 = vmatpush1.bf16.msra.mxu0 %v554
    %743 = vmatprep.subr.bf16.mxu0 0
    %744 = vmatpush1.bf16.msra.mxu0 %v555
    %745 = vmatprep.subr.bf16.mxu0 0
    %746 = vmatpush1.bf16.msra.mxu0 %v556
    %747 = vmatprep.subr.bf16.mxu0 0
    %748 = vmatpush1.bf16.msra.mxu0 %v557
    %749 = vmatprep.subr.bf16.mxu0 0
    %750 = vmatpush1.bf16.msra.mxu0 %v558
    %751 = vmatprep.mubr.bf16.mxu0 %v242
    %752 = vmatmul.mubr.bf16.gmra.mrb[0].mxu0 %v228
    %v753 = vpop.f32.mrb[0].mxu0
    %v754 = vadd.f32 %v714, %v753
    %v755 = vpop.f32.mrb[0].mxu0
    %v756 = vpop.f32.mrb[0].mxu0
    %v757 = vpop.f32.mrb[0].mxu0
    %758 = vdwg.mxu0
    %759 = vmatprep.subr.bf16.mxu0 0
    %760 = vmatpush1.bf16.msra.mxu0 %v559
    %761 = vmatprep.subr.bf16.mxu0 0
    %762 = vmatpush1.bf16.msra.mxu0 %v560
    %763 = vmatprep.subr.bf16.mxu0 0
    %764 = vmatpush1.bf16.msra.mxu0 %v561
    %765 = vmatprep.subr.bf16.mxu0 0
    %766 = vmatpush1.bf16.msra.mxu0 %v562
    %767 = vmatprep.subr.bf16.mxu0 0
    %768 = vmatpush1.bf16.msra.mxu0 %v563
    %769 = vmatprep.subr.bf16.mxu0 0
    %770 = vmatpush1.bf16.msra.mxu0 %v564
    %771 = vmatprep.subr.bf16.mxu0 0
    %772 = vmatpush1.bf16.msra.mxu0 %v565
    %773 = vmatprep.subr.bf16.mxu0 0
    %774 = vmatpush1.bf16.msra.mxu0 %v566
    %775 = vmatprep.subr.bf16.mxu0 0
    %776 = vmatpush1.bf16.msra.mxu0 %v567
    %777 = vmatprep.subr.bf16.mxu0 0
    %778 = vmatpush1.bf16.msra.mxu0 %v568
    %779 = vmatprep.subr.bf16.mxu0 0
    %780 = vmatpush1.bf16.msra.mxu0 %v569
    %781 = vmatprep.subr.bf16.mxu0 0
    %782 = vmatpush1.bf16.msra.mxu0 %v570
    %783 = vmatprep.subr.bf16.mxu0 0
    %784 = vmatpush1.bf16.msra.mxu0 %v571
    %785 = vmatprep.subr.bf16.mxu0 0
    %786 = vmatpush1.bf16.msra.mxu0 %v572
    %787 = vmatprep.subr.bf16.mxu0 0
    %788 = vmatpush1.bf16.msra.mxu0 %v573
    %789 = vmatprep.subr.bf16.mxu0 0
    %790 = vmatpush1.bf16.msra.mxu0 %v574
    %791 = vmatprep.mubr.bf16.mxu0 %v246
    %792 = vmatmul.mubr.bf16.gmra.mrb[0].mxu0 %v244
    %v793 = vpop.f32.mrb[0].mxu0
    %v794 = vadd.f32 %v754, %v793
    %v795 = vpop.f32.mrb[0].mxu0
    %v796 = vpop.f32.mrb[0].mxu0
    %v797 = vpop.f32.mrb[0].mxu0
    %798 = vdwg.mxu0
    %v799 = vmax.f32 %v794, 0.0
    %v800 = vpack.c.bf16 %v799, %v799
    %v801 = vld [vmem:[%s3] sm:$0xf]
    %v802 = vld [vmem:[%s3 + $0x4] sm:$0xf]
    %v803 = vld [vmem:[%s3 + $0x8] sm:$0xf]
    %v804 = vld [vmem:[%s3 + $0xc] sm:$0xf]
    %v805 = vld [vmem:[%s3 + $0x10] sm:$0xf]
    %v806 = vld [vmem:[%s3 + $0x14] sm:$0xf]
    %v807 = vld [vmem:[%s3 + $0x18] sm:$0xf]
    %v808 = vld [vmem:[%s3 + $0x1c] sm:$0xf]
    %v809 = vld [vmem:[%s3 + $0x20] sm:$0xf]
    %v810 = vld [vmem:[%s3 + $0x24] sm:$0xf]
    %v811 = vld [vmem:[%s3 + $0x28] sm:$0xf]
    %v812 = vld [vmem:[%s3 + $0x2c] sm:$0xf]
    %v813 = vld [vmem:[%s3 + $0x30] sm:$0xf]
    %v814 = vld [vmem:[%s3 + $0x34] sm:$0xf]
    %v815 = vld [vmem:[%s3 + $0x38] sm:$0xf]
    %v816 = vld [vmem:[%s3 + $0x3c] sm:$0xf]
    %v817 = vld [vmem:[%s4] sm:$0x1]
    %v819 = vlaneseq
    %v820 = vshrl.u32 %v819, 7
    %v821 = vsub.s32 0, %v820
    %v822 = vrot.slane %v817, %v821
    %v840 = vunpack.c.l.b16 %v801
    %v841 = vunpack.c.l.b16 %v802
    %v842 = vunpack.c.l.b16 %v803
    %v843 = vunpack.c.l.b16 %v804
    %v844 = vunpack.c.l.b16 %v805
    %v845 = vunpack.c.l.b16 %v806
    %v846 = vunpack.c.l.b16 %v807
    %v847 = vunpack.c.l.b16 %v808
    %v848 = vunpack.c.l.b16 %v809
    %v849 = vunpack.c.l.b16 %v810
    %v850 = vunpack.c.l.b16 %v811
    %v851 = vunpack.c.l.b16 %v812
    %v852 = vunpack.c.l.b16 %v813
    %v853 = vunpack.c.l.b16 %v814
    %v854 = vunpack.c.l.b16 %v815
    %v855 = vunpack.c.l.b16 %v816
    %v856 = vpack.c.b16 %v841, %v840
    %v857 = vpack.c.b16 %v843, %v842
    %v858 = vpack.c.b16 %v845, %v844
    %v859 = vpack.c.b16 %v847, %v846
    %v860 = vpack.c.b16 %v849, %v848
    %v861 = vpack.c.b16 %v851, %v850
    %v862 = vpack.c.b16 %v853, %v852
    %v863 = vpack.c.b16 %v855, %v854
    %872 = vmatprep.subr.bf16.mxu0 0
    %873 = vmatpush1.bf16.msra.mxu0 %v856
    %874 = vmatprep.subr.bf16.mxu0 0
    %875 = vmatpush1.bf16.msra.mxu0 %v857
    %876 = vmatprep.subr.bf16.mxu0 0
    %877 = vmatpush1.bf16.msra.mxu0 %v858
    %878 = vmatprep.subr.bf16.mxu0 0
    %879 = vmatpush1.bf16.msra.mxu0 %v859
    %880 = vmatprep.subr.bf16.mxu0 0
    %881 = vmatpush1.bf16.msra.mxu0 %v860
    %882 = vmatprep.subr.bf16.mxu0 0
    %883 = vmatpush1.bf16.msra.mxu0 %v861
    %884 = vmatprep.subr.bf16.mxu0 0
    %885 = vmatpush1.bf16.msra.mxu0 %v862
    %886 = vmatprep.subr.bf16.mxu0 0
    %887 = vmatpush1.bf16.msra.mxu0 %v863
    %888 = vmatprep.subr.bf16.mxu0 0
    %889 = vmatpush1.bf16.msra.mxu0 0
    %890 = vmatprep.subr.bf16.mxu0 0
    %891 = vmatpush1.bf16.msra.mxu0 0
    %892 = vmatprep.subr.bf16.mxu0 0
    %893 = vmatpush1.bf16.msra.mxu0 0
    %894 = vmatprep.subr.bf16.mxu0 0
    %895 = vmatpush1.bf16.msra.mxu0 0
    %896 = vmatprep.subr.bf16.mxu0 0
    %897 = vmatpush1.bf16.msra.mxu0 0
    %898 = vmatprep.subr.bf16.mxu0 0
    %899 = vmatpush1.bf16.msra.mxu0 0
    %900 = vmatprep.subr.bf16.mxu0 0
    %901 = vmatpush1.bf16.msra.mxu0 0
    %902 = vmatprep.subr.bf16.mxu0 0
    %903 = vmatpush1.bf16.msra.mxu0 0
    %904 = vmatprep.mubr.bf16.mxu0 0
    %905 = vmatmul.mubr.bf16.gmra.mrb[0].mxu0 %v800
    %v906 = vpop.f32.mrb[0].mxu0
    %v907 = vadd.f32 %v822, %v906
    %v908 = vpop.f32.mrb[0].mxu0
    %v909 = vpop.f32.mrb[0].mxu0
    %v910 = vpop.f32.mrb[0].mxu0
    %911 = vdwg.mxu0
    %912 = vmax.xlane.f32.xlu0 %v907
    %v913 = vpop.xlane.xlu0 %912
    %v914 = vsub.f32 %v907, %v913
    %v915 = vmul.f32 %v914, 1.442695
    %v916 = vpow.pop %v915
    %917 = vadd.xlane.f32.xlu0 %v916
    %v918 = vpop.xlane.xlu0 %917
    %v919 = vrcp.pop %v918
    %v920 = vmul.f32 %v916, %v919
    %921 = vst [vmem:[#allocation5] sm:$0xff] %v920
    // Predicated region
    $region26: #{mlp_forward.1} parent=1 // pred_check
      _
    $region27: #{mlp_forward.1} parent=1 // pred_check_branch
      %923 = sbr.rel (0) target = $region29
    $region28: #{mlp_forward.1} parent=1 // pred_region
      %s925 = ssub.s32 128, 32
      %926 = vsyncadd [#allocation4], %s925
      %s927 = sshll.u32 [#allocation5], 4
      %s928 = int_to_ptr.vmem [resolvable:$true] %s927
      %933 = dma.vmem_to_hbm [thread:$0]  %s928, 32, %s5, [#allocation4], 32, 32, 2
    $region29: #{mlp_forward.1} parent=1 // pred_fallthru
      _
    // Predicated region
    $region30: #{mlp_forward.1} parent=1 // pred_check
      _
    $region31: #{mlp_forward.1} parent=1 // pred_check_branch
      %935 = sbr.rel (0) target = $region33
    $region32: #{mlp_forward.1} parent=1 // pred_region
      %936 = dma.done [#allocation4], 128
    $region33: #{mlp_forward.1} parent=1 // pred_fallthru
      _
    %937 = vsyncpa [#allocation3], 1
    %938 = vsyncpa [#allocation4], 1

</llo_original>
